<compile_context>
chip_gen: v6e
topology: v6e:2x2x1
jax: 0.10.0
libtpu: 0.0.40
codegen_flags: <defaults>
</compile_context>

<pallas_src>
import jax
import jax.numpy as jnp
from jax.experimental import pallas as pl
from jax.experimental.pallas import tpu as pltpu

K = 5
PAD = 2
BN_EPS = 1e-5
VMEM_LIMIT = 32 * 1024 * 1024   # safe on v5e/v6e (128 MiB) and v7x (64 MiB)


def conv_stats_kernel(x_ref, m_ref, conv_ref, stats_ref):
    """Pass 1: 5x5 conv for one image + global per-(w,c) sum / sumsq."""
    # x_ref:     (1, Hp, Wp*Cin)      padded, lane-dense input for image n
    # m_ref:     (K, Wp*Cin, W*Cout)  block-banded conv weights (VMEM-resident)
    # conv_ref:  (1, H, W*Cout)       conv output block for image n
    # stats_ref: (2, W*Cout)          resident accumulator: [sum; sum_of_squares]
    h_out = conv_ref.shape[1]

    @pl.when(pl.program_id(0) == 0)
    def _init():
        stats_ref[...] = jnp.zeros_like(stats_ref)

    # Per-image tile is small and lane-dense (20 x 80 f32), so a single load is
    # cheap; no monolithic low-density NHWC materialization anymore.
    x = x_ref[0].astype(jnp.float32)                      # (Hp, Wp*Cin)

    acc = jnp.zeros(conv_ref.shape[1:], jnp.float32)      # (H, W*Cout)
    for kh in range(m_ref.shape[0]):                      # only K=5 MXU dots
        acc = acc + jnp.dot(x[kh:kh + h_out, :], m_ref[kh],
                            preferred_element_type=jnp.float32)
    conv_ref[0] = acc

    stats_ref[0:1, :] = stats_ref[0:1, :] + jnp.sum(acc, axis=0, keepdims=True)
    stats_ref[1:2, :] = stats_ref[1:2, :] + jnp.sum(acc * acc, axis=0,
                                                    keepdims=True)


def bn_prelu_kernel(conv_ref, scale_ref, shift_ref, alpha_ref, o_ref):
    """Pass 2: fused BN affine (y = conv*scale + shift) + PReLU for one image."""
    y = conv_ref[0] * scale_ref[...] + shift_ref[...]             # (H, W*Cout)
    o_ref[0] = jnp.where(y >= 0.0, y, alpha_ref[...] * y).astype(o_ref.dtype)


def output_transition(x_nchw, conv_w, conv_b, bn_gamma, bn_beta, prelu_alpha):
    """Forward pass of OutputTransition. x_nchw: (N, Cin, H, W) float32.

    conv_b is accepted for API parity but unused: a constant per-channel bias
    is cancelled exactly by training-mode BatchNorm mean subtraction.
    """
    del conv_b
    N, Cin, H, W = x_nchw.shape
    Cout = conv_w.shape[0]
    Hp, Wp = H + 2 * PAD, W + 2 * PAD
    WC = W * Cout

    # ---- glue: layout plumbing only (no per-pixel compute) ------------------
    x_nhwc = jnp.transpose(x_nchw, (0, 2, 3, 1))
    x_pad = jnp.pad(x_nhwc, ((0, 0), (PAD, PAD), (PAD, PAD), (0, 0)))
    x_p = x_pad.reshape(N, Hp, Wp * Cin)                  # lane-dense input

    # Block-banded weights: M[kh, wp*Cin+ci, w*Cout+co] = w[co, ci, kh, wp-w]
    wt = jnp.transpose(conv_w, (2, 3, 1, 0)).astype(jnp.float32)  # (K,K,Cin,Cout)
    w_idx = jnp.arange(W)
    m5 = jnp.zeros((K, Wp, Cin, W, Cout), jnp.float32)
    for kw in range(K):
        sel = jnp.zeros((Wp, W), jnp.float32).at[w_idx + kw, w_idx].set(1.0)
        m5 = m5 + jnp.einsum('kio,pw->kpiwo', wt[:, kw], sel)
    m = m5.reshape(K, Wp * Cin, WC)

    # ---- pass 1: conv + global BN statistics (grid over batch) --------------
    conv_out, stats = pl.pallas_call(
        conv_stats_kernel,
        out_shape=(jax.ShapeDtypeStruct((N, H, WC), jnp.float32),
                   jax.ShapeDtypeStruct((2, WC), jnp.float32)),
        grid=(N,),
        in_specs=[pl.BlockSpec((1, Hp, Wp * Cin), lambda n: (n, 0, 0)),
                  pl.BlockSpec((K, Wp * Cin, WC), lambda n: (0, 0, 0))],
        out_specs=(pl.BlockSpec((1, H, WC), lambda n: (n, 0, 0)),
                   pl.BlockSpec((2, WC), lambda n: (0, 0))),
        compiler_params=pltpu.CompilerParams(
            dimension_semantics=("arbitrary",),          # stats accumulator
            vmem_limit_bytes=VMEM_LIMIT),
    )(x_p, m)

    # O(Cout) scalar math: fold BN into a single per-channel scale/shift.
    # var = E[x^2] - E[x]^2 is numerically safe here: the conv output has no
    # bias term (dropped above), so |mean| << std, and all sums are f32.
    count = jnp.float32(N * H * W)
    ch_sum = stats[0].reshape(W, Cout).sum(axis=0)
    ch_sq = stats[1].reshape(W, Cout).sum(axis=0)
    mean = ch_sum / count
    var = jnp.maximum(ch_sq / count - mean * mean, 0.0)
    scale = bn_gamma.astype(jnp.float32) * jax.lax.rsqrt(var + BN_EPS)
    shift = bn_beta.astype(jnp.float32) - mean * scale
    # Tile the per-channel vectors to the (w*Cout + c) lane pattern of the tiles.
    scale_t = jnp.tile(scale, W)[None, :]
    shift_t = jnp.tile(shift, W)[None, :]
    alpha_t = jnp.tile(prelu_alpha.astype(jnp.float32), W)[None, :]

    # ---- pass 2: fused BN affine + PReLU + flattened-layout store ------------
    out = pl.pallas_call(
        bn_prelu_kernel,
        out_shape=jax.ShapeDtypeStruct((N, H, WC), x_nchw.dtype),
        grid=(N,),
        in_specs=[pl.BlockSpec((1, H, WC), lambda n: (n, 0, 0)),
                  pl.BlockSpec((1, WC), lambda n: (0, 0)),
                  pl.BlockSpec((1, WC), lambda n: (0, 0)),
                  pl.BlockSpec((1, WC), lambda n: (0, 0))],
        out_specs=pl.BlockSpec((1, H, WC), lambda n: (n, 0, 0)),
        compiler_params=pltpu.CompilerParams(
            dimension_semantics=("parallel",),           # 2 TCs on v7x
            vmem_limit_bytes=VMEM_LIMIT),
    )(conv_out, scale_t, shift_t, alpha_t)

    # (N, H, W*Cout) row-major element order == permute(0,2,3,1).view(N, -1).
    return out.reshape(N, H * WC)


def reference(x_nchw, conv_w, conv_b, bn_gamma, bn_beta, prelu_alpha):
    """Pure-JAX reference of the PyTorch forward (training-mode BN)."""
    out = jax.lax.conv_general_dilated(
        x_nchw, conv_w, window_strides=(1, 1),
        padding=((PAD, PAD), (PAD, PAD)),
        dimension_numbers=('NCHW', 'OIHW', 'NCHW'))
    out = out + conv_b[None, :, None, None]
    mean = out.mean(axis=(0, 2, 3), keepdims=True)
    var = ((out - mean) ** 2).mean(axis=(0, 2, 3), keepdims=True)
    y = (out - mean) / jnp.sqrt(var + BN_EPS)
    y = y * bn_gamma[None, :, None, None] + bn_beta[None, :, None, None]
    y = jnp.where(y >= 0.0, y, prelu_alpha[None, :, None, None] * y)
    y = jnp.transpose(y, (0, 2, 3, 1))
    return y.reshape(y.shape[0], -1)


if __name__ == "__main__":
    # Small shapes consistent with the module: batch=2, ch_in=4, n_classes=3,
    # spatial 16x16.
    N, Cin, H, W = 2, 4, 16, 16
    Cout = 3

    key = jax.random.PRNGKey(0)
    kx, kw_key, kb_key = jax.random.split(key, 3)

    x = jax.random.normal(kx, (N, Cin, H, W), dtype=jnp.float32)

    # Deterministic parameter init (PyTorch-style defaults, synthetic values).
    fan_in = Cin * K * K
    bound = 1.0 / (fan_in ** 0.5)
    conv_w = jax.random.uniform(kw_key, (Cout, Cin, K, K), jnp.float32,
                                minval=-bound, maxval=bound)
    conv_b = jax.random.uniform(kb_key, (Cout,), jnp.float32,
                                minval=-bound, maxval=bound)
    bn_gamma = jnp.ones((Cout,), jnp.float32)        # BatchNorm2d default weight
    bn_beta = jnp.zeros((Cout,), jnp.float32)        # BatchNorm2d default bias
    prelu_alpha = jnp.full((Cout,), 0.25, jnp.float32)   # PReLU default

    out = output_transition(x, conv_w, conv_b, bn_gamma, bn_beta, prelu_alpha)
    out = jax.block_until_ready(out)

    ref = reference(x, conv_w, conv_b, bn_gamma, bn_beta, prelu_alpha)
    assert out.shape == (N, H * W * Cout), out.shape
    assert jnp.allclose(out, ref, rtol=1e-3, atol=2e-3), (
        float(jnp.max(jnp.abs(out - ref))))

    print("KERNEL_OK")
</pallas_src>

<mosaic_0001>
module attributes {stable_mosaic.version = 11 : i64} {
  func.func @conv_stats_kernel(%arg0: i32, %arg1: memref<1x20x80xf32, #tpu.memory_space<vmem>>, %arg2: memref<5x80x48xf32, #tpu.memory_space<vmem>>, %arg3: memref<1x16x48xf32, #tpu.memory_space<vmem>>, %arg4: memref<2x48xf32, #tpu.memory_space<vmem>>) attributes {dimension_semantics = [#tpu.dimension_semantics<arbitrary>], iteration_bounds = array<i64: 2>, scalar_prefetch = 0 : i64, scratch_operands = 0 : i64, tpu.core_type = #tpu.core_type<tc>, window_params = [{transform_indices = @transform_0, window_bounds = array<i64: 1, 20, 80>}, {pipeline_mode = #tpu.pipeline_mode<synchronous>, transform_indices = @transform_1, window_bounds = array<i64: 5, 80, 48>}, {transform_indices = @transform_2, window_bounds = array<i64: 1, 16, 48>}, {pipeline_mode = #tpu.pipeline_mode<synchronous>, transform_indices = @transform_3, window_bounds = array<i64: 2, 48>}]} {
    %c0_i32 = arith.constant 0 : i32
    %0 = arith.cmpi eq, %arg0, %c0_i32 : i32
    %1 = arith.extui %0 : i1 to i32
    %c0_i32_0 = arith.constant 0 : i32
    %2 = arith.cmpi ne, %1, %c0_i32_0 : i32
    scf.if %2 {
      %cst_32 = arith.constant 0.000000e+00 : f32
      %45 = vector.broadcast %cst_32 : f32 to vector<2x48xf32>
      %c0_33 = arith.constant 0 : index
      %c0_34 = arith.constant 0 : index
      %46 = vector.load %arg4[%c0_33, %c0_34] : memref<2x48xf32, #tpu.memory_space<vmem>>, vector<2x48xf32>
      tpu.vector_store %arg4[%c0_33, %c0_34], %45 {strides = array<i32>} : memref<2x48xf32, #tpu.memory_space<vmem>>, vector<2x48xf32>,
    } else {
    }
    %c0 = arith.constant 0 : index
    %c0_1 = arith.constant 0 : index
    %c0_2 = arith.constant 0 : index
    %3 = vector.load %arg1[%c0, %c0_1, %c0_2] : memref<1x20x80xf32, #tpu.memory_space<vmem>>, vector<1x20x80xf32>
    %4 = vector.shape_cast %3 : vector<1x20x80xf32> to vector<20x80xf32>
    %cst = arith.constant 0.000000e+00 : f32
    %5 = vector.broadcast %cst : f32 to vector<16x48xf32>
    %6 = vector.extract_strided_slice %4 {offsets = [0, 0], sizes = [16, 80], strides = [1, 1]} : vector<20x80xf32> to vector<16x80xf32>
    %c0_3 = arith.constant 0 : index
    %c0_4 = arith.constant 0 : index
    %c0_5 = arith.constant 0 : index
    %7 = vector.load %arg2[%c0_3, %c0_4, %c0_5] : memref<5x80x48xf32, #tpu.memory_space<vmem>>, vector<1x80x48xf32>
    %8 = vector.shape_cast %7 : vector<1x80x48xf32> to vector<80x48xf32>
    %cst_6 = arith.constant dense<0.000000e+00> : vector<16x48xf32>
    %9 = tpu.matmul %6, %8, %cst_6 {dimension_numbers = #tpu.dot_dimension_numbers<[1], [0], [0], [1], [0, 0, 1, 1], [], []>} : vector<16x80xf32>, vector<80x48xf32>, vector<16x48xf32> -> vector<16x48xf32>
    %10 = arith.addf %5, %9 : vector<16x48xf32>
    %11 = vector.extract_strided_slice %4 {offsets = [1, 0], sizes = [16, 80], strides = [1, 1]} : vector<20x80xf32> to vector<16x80xf32>
    %c1 = arith.constant 1 : index
    %c0_7 = arith.constant 0 : index
    %c0_8 = arith.constant 0 : index
    %12 = vector.load %arg2[%c1, %c0_7, %c0_8] : memref<5x80x48xf32, #tpu.memory_space<vmem>>, vector<1x80x48xf32>
    %13 = vector.shape_cast %12 : vector<1x80x48xf32> to vector<80x48xf32>
    %cst_9 = arith.constant dense<0.000000e+00> : vector<16x48xf32>
    %14 = tpu.matmul %11, %13, %cst_9 {dimension_numbers = #tpu.dot_dimension_numbers<[1], [0], [0], [1], [0, 0, 1, 1], [], []>} : vector<16x80xf32>, vector<80x48xf32>, vector<16x48xf32> -> vector<16x48xf32>
    %15 = arith.addf %10, %14 : vector<16x48xf32>
    %16 = vector.extract_strided_slice %4 {offsets = [2, 0], sizes = [16, 80], strides = [1, 1]} : vector<20x80xf32> to vector<16x80xf32>
    %c2 = arith.constant 2 : index
    %c0_10 = arith.constant 0 : index
    %c0_11 = arith.constant 0 : index
    %17 = vector.load %arg2[%c2, %c0_10, %c0_11] : memref<5x80x48xf32, #tpu.memory_space<vmem>>, vector<1x80x48xf32>
    %18 = vector.shape_cast %17 : vector<1x80x48xf32> to vector<80x48xf32>
    %cst_12 = arith.constant dense<0.000000e+00> : vector<16x48xf32>
    %19 = tpu.matmul %16, %18, %cst_12 {dimension_numbers = #tpu.dot_dimension_numbers<[1], [0], [0], [1], [0, 0, 1, 1], [], []>} : vector<16x80xf32>, vector<80x48xf32>, vector<16x48xf32> -> vector<16x48xf32>
    %20 = arith.addf %15, %19 : vector<16x48xf32>
    %21 = vector.extract_strided_slice %4 {offsets = [3, 0], sizes = [16, 80], strides = [1, 1]} : vector<20x80xf32> to vector<16x80xf32>
    %c3 = arith.constant 3 : index
    %c0_13 = arith.constant 0 : index
    %c0_14 = arith.constant 0 : index
    %22 = vector.load %arg2[%c3, %c0_13, %c0_14] : memref<5x80x48xf32, #tpu.memory_space<vmem>>, vector<1x80x48xf32>
    %23 = vector.shape_cast %22 : vector<1x80x48xf32> to vector<80x48xf32>
    %cst_15 = arith.constant dense<0.000000e+00> : vector<16x48xf32>
    %24 = tpu.matmul %21, %23, %cst_15 {dimension_numbers = #tpu.dot_dimension_numbers<[1], [0], [0], [1], [0, 0, 1, 1], [], []>} : vector<16x80xf32>, vector<80x48xf32>, vector<16x48xf32> -> vector<16x48xf32>
    %25 = arith.addf %20, %24 : vector<16x48xf32>
    %26 = vector.extract_strided_slice %4 {offsets = [4, 0], sizes = [16, 80], strides = [1, 1]} : vector<20x80xf32> to vector<16x80xf32>
    %c4 = arith.constant 4 : index
    %c0_16 = arith.constant 0 : index
    %c0_17 = arith.constant 0 : index
    %27 = vector.load %arg2[%c4, %c0_16, %c0_17] : memref<5x80x48xf32, #tpu.memory_space<vmem>>, vector<1x80x48xf32>
    %28 = vector.shape_cast %27 : vector<1x80x48xf32> to vector<80x48xf32>
    %cst_18 = arith.constant dense<0.000000e+00> : vector<16x48xf32>
    %29 = tpu.matmul %26, %28, %cst_18 {dimension_numbers = #tpu.dot_dimension_numbers<[1], [0], [0], [1], [0, 0, 1, 1], [], []>} : vector<16x80xf32>, vector<80x48xf32>, vector<16x48xf32> -> vector<16x48xf32>
    %30 = arith.addf %25, %29 : vector<16x48xf32>
    %c0_19 = arith.constant 0 : index
    %c0_20 = arith.constant 0 : index
    %c0_21 = arith.constant 0 : index
    %31 = vector.load %arg3[%c0_19, %c0_20, %c0_21] : memref<1x16x48xf32, #tpu.memory_space<vmem>>, vector<1x16x48xf32>
    %32 = vector.shape_cast %31 : vector<1x16x48xf32> to vector<16x48xf32>
    %33 = vector.shape_cast %30 : vector<16x48xf32> to vector<1x16x48xf32>
    tpu.vector_store %arg3[%c0_19, %c0_20, %c0_21], %33 {strides = array<i32>} : memref<1x16x48xf32, #tpu.memory_space<vmem>>, vector<1x16x48xf32>,
    %c0_22 = arith.constant 0 : index
    %c0_23 = arith.constant 0 : index
    %34 = vector.load %arg4[%c0_22, %c0_23] : memref<2x48xf32, #tpu.memory_space<vmem>>, vector<1x48xf32>
    %cst_24 = arith.constant dense<0.000000e+00> : vector<48xf32>
    %35 = vector.multi_reduction <add>, %30, %cst_24 [0] : vector<16x48xf32> to vector<48xf32>
    %36 = vector.shape_cast %35 : vector<48xf32> to vector<1x48xf32>
    %37 = arith.addf %34, %36 : vector<1x48xf32>
    %c0_25 = arith.constant 0 : index
    %c0_26 = arith.constant 0 : index
    %38 = vector.load %arg4[%c0_25, %c0_26] : memref<2x48xf32, #tpu.memory_space<vmem>>, vector<1x48xf32>
    tpu.vector_store %arg4[%c0_25, %c0_26], %37 {strides = array<i32>} : memref<2x48xf32, #tpu.memory_space<vmem>>, vector<1x48xf32>,
    %c1_27 = arith.constant 1 : index
    %c0_28 = arith.constant 0 : index
    %39 = vector.load %arg4[%c1_27, %c0_28] : memref<2x48xf32, #tpu.memory_space<vmem>>, vector<1x48xf32>
    %40 = arith.mulf %30, %30 : vector<16x48xf32>
    %cst_29 = arith.constant dense<0.000000e+00> : vector<48xf32>
    %41 = vector.multi_reduction <add>, %40, %cst_29 [0] : vector<16x48xf32> to vector<48xf32>
    %42 = vector.shape_cast %41 : vector<48xf32> to vector<1x48xf32>
    %43 = arith.addf %39, %42 : vector<1x48xf32>
    %c1_30 = arith.constant 1 : index
    %c0_31 = arith.constant 0 : index
    %44 = vector.load %arg4[%c1_30, %c0_31] : memref<2x48xf32, #tpu.memory_space<vmem>>, vector<1x48xf32>
    tpu.vector_store %arg4[%c1_30, %c0_31], %43 {strides = array<i32>} : memref<2x48xf32, #tpu.memory_space<vmem>>, vector<1x48xf32>,
    return
  }
  func.func @transform_0(%arg0: i32) -> (i32, i32, i32) {
    %c0_i32 = arith.constant 0 : i32
    %c0_i32_0 = arith.constant 0 : i32
    %c0_i32_1 = arith.constant 0 : i32
    return %arg0, %c0_i32, %c0_i32_0 : i32, i32, i32
  }
  func.func @transform_1(%arg0: i32) -> (i32, i32, i32) {
    %c0_i32 = arith.constant 0 : i32
    %c0_i32_0 = arith.constant 0 : i32
    %c0_i32_1 = arith.constant 0 : i32
    %c0_i32_2 = arith.constant 0 : i32
    return %c0_i32, %c0_i32_0, %c0_i32_1 : i32, i32, i32
  }
  func.func @transform_2(%arg0: i32) -> (i32, i32, i32) {
    %c0_i32 = arith.constant 0 : i32
    %c0_i32_0 = arith.constant 0 : i32
    %c0_i32_1 = arith.constant 0 : i32
    return %arg0, %c0_i32, %c0_i32_0 : i32, i32, i32
  }
  func.func @transform_3(%arg0: i32) -> (i32, i32) {
    %c0_i32 = arith.constant 0 : i32
    %c0_i32_0 = arith.constant 0 : i32
    %c0_i32_1 = arith.constant 0 : i32
    return %c0_i32, %c0_i32_0 : i32, i32
  }
}

</mosaic_0001>

<llo_original>
// kernel: tpu_custom_call.1
$region0: #{tpu_custom_call.1}
  #allocation0 [shape = 'u32[]', space=smem, size = 0x4, offset = 0x4, fixed_abs, tag = 'smem constant byte address 0x4 - core index']
  #allocation1 [shape = 'u32[144,128]{1,0:T(1,128)}', space=vmem, size = 0x12000, scoped, tag = 'internal scratch']
  %s0 = inlined_call_operand.vmem [shape: f32[2,20,80], index: 0, kind: input, shape index: {}]
  %s1 = inlined_call_operand.vmem [shape: f32[5,80,48], index: 1, kind: input, shape index: {}]
  %s2 = inlined_call_operand.hbm [shape: f32[2,16,48], index: 2, kind: output, shape index: {0}]
  %s3 = inlined_call_operand.hbm [shape: f32[2,48], index: 3, kind: output, shape index: {1}]
  %4 = xla_tuple %s2, %s3
  %s5 = sld [smem:[#allocation0]]
  $region53: #{tpu_custom_call.1} parent=0
    _
  %s7 = ssub.s32 1, %s5
  %s8 = scalar_select 0, %s7, %s5
  $region1: #{tpu_custom_call.1} parent=0
    #allocation2 [shape = 'u8[16384]{0}', space=vmem, size = 0x4000, scoped, tag = 'output window, operand 0']
    #allocation3 [shape = 's32[2]{0}', space=sflag, size = 0x8, scoped, tag = 'scoped memory for tpu_custom_call.1']
    #allocation4 [shape = 'u8[1024]{0}', space=vmem, size = 0x400, scoped, tag = 'output window, operand 1, single buffered']
    #allocation5 [shape = 's32[1]{0}', space=sflag, size = 0x4, scoped, tag = 'scoped memory for tpu_custom_call.1']
    %9 = vsyncpa [#allocation3], 0
    %s10 = scalar_lea.sflag [#allocation3], 1
    %11 = vsyncpa %s10, 0
    %12 = vsyncpa [#allocation5], 0
    loop: start=0, step=1, limit=4
    $region2: #{tpu_custom_call.1} parent=1 // loop_pre_header
      _
    $region3: #{tpu_custom_call.1} parent=1 // loop_header
      %s14 = sphi 0, %s18
      %p15 = scmp.ge.s32.totalorder %s14, 4
      %s24 = sphi 0, %s26
      %s27 = sphi 0, %s24
      %s28 = sphi 0, %s27
      %s44 = sphi 0, %s28
      %s48 = sphi 0, %s48
      %s50 = sphi 0, %s48
      %s51 = sphi 0, %s50
      %s65 = sphi 0, %s51
      %s71 = sphi 0, %s73
      %s74 = sphi 0, %s71
      %s75 = sphi 0, %s74
      %s91 = sphi 0, %s75
      %s95 = sphi 0, %s95
      %s97 = sphi 0, %s95
      %s98 = sphi 0, %s97
      %s112 = sphi 0, %s98
    $region4: #{tpu_custom_call.1} parent=1 // loop_header_branch
      %17 = sbr.rel (%p15) target = $region8
    $region5: #{tpu_custom_call.1} parent=1 // loop_body
      %s19 = ssub.s32 %s14, 1
      %s20 = ssub.s32 %s14, 2
      %s21 = sadd.s32 %s14, 1
      %s22 = ssub.s32 %s14, %s21
      %p23 = scmp.eq.s32.totalorder %s22, 0
      %s25 = sadd.s32 %s24, 1
      %s26 = scalar_select %p23, %s24, %s25
      %p29 = pneg %p23
      %p30 = scmp.eq.s32.totalorder %s14, 1
      %p31 = por %p29, %p30
      %p32 = scmp.ne.s32.totalorder %s24, %s27
      %p33 = scmp.eq.s32.totalorder %s14, 0
      %p34 = por %p32, %p33
      %p35 = scmp.ne.s32.totalorder %s24, %s27
      %p36 = scmp.eq.s32.totalorder %s19, 1
      %p37 = por %p35, %p36
      %p38 = scmp.ne.s32.totalorder %s27, %s28
      %p39 = scmp.eq.s32.totalorder %s19, 0
      %p40 = por %p38, %p39
      %p41 = scmp.ne.s32.totalorder %s27, %s28
      %p42 = scmp.eq.s32.totalorder %s20, 1
      %p43 = por %p41, %p42
      %p45 = scmp.ne.s32.totalorder %s28, %s44
      %p46 = scmp.eq.s32.totalorder %s20, 0
      %p47 = por %p45, %p46
      %s49 = sadd.s32 %s48, 1
      %p52 = scmp.eq.s32.totalorder %s14, 1
      %p53 = scmp.ne.s32.totalorder %s48, %s50
      %p54 = scmp.eq.s32.totalorder %s14, 0
      %p55 = por %p53, %p54
      %p56 = scmp.ne.s32.totalorder %s48, %s50
      %p57 = scmp.eq.s32.totalorder %s19, 1
      %p58 = por %p56, %p57
      %p59 = scmp.ne.s32.totalorder %s50, %s51
      %p60 = scmp.eq.s32.totalorder %s19, 0
      %p61 = por %p59, %p60
      %p62 = scmp.ne.s32.totalorder %s50, %s51
      %p63 = scmp.eq.s32.totalorder %s20, 1
      %p64 = por %p62, %p63
      %p66 = scmp.ne.s32.totalorder %s51, %s65
      %p67 = scmp.eq.s32.totalorder %s20, 0
      %p68 = por %p66, %p67
      %s69 = ssub.s32 %s14, %s21
      %p70 = scmp.eq.s32.totalorder %s69, 0
      %s72 = sadd.s32 %s71, 1
      %s73 = scalar_select %p70, %s71, %s72
      %p76 = pneg %p70
      %p77 = scmp.eq.s32.totalorder %s14, 1
      %p78 = por %p76, %p77
      %p79 = scmp.ne.s32.totalorder %s71, %s74
      %p80 = scmp.eq.s32.totalorder %s14, 0
      %p81 = por %p79, %p80
      %p82 = scmp.ne.s32.totalorder %s71, %s74
      %p83 = scmp.eq.s32.totalorder %s19, 1
      %p84 = por %p82, %p83
      %p85 = scmp.ne.s32.totalorder %s74, %s75
      %p86 = scmp.eq.s32.totalorder %s19, 0
      %p87 = por %p85, %p86
      %p88 = scmp.ne.s32.totalorder %s74, %s75
      %p89 = scmp.eq.s32.totalorder %s20, 1
      %p90 = por %p88, %p89
      %p92 = scmp.ne.s32.totalorder %s75, %s91
      %p93 = scmp.eq.s32.totalorder %s20, 0
      %p94 = por %p92, %p93
      %s96 = sadd.s32 %s95, 1
      %p99 = scmp.eq.s32.totalorder %s14, 1
      %p100 = scmp.ne.s32.totalorder %s95, %s97
      %p101 = scmp.eq.s32.totalorder %s14, 0
      %p102 = por %p100, %p101
      %p103 = scmp.ne.s32.totalorder %s95, %s97
      %p104 = scmp.eq.s32.totalorder %s19, 1
      %p105 = por %p103, %p104
      %p106 = scmp.ne.s32.totalorder %s97, %s98
      %p107 = scmp.eq.s32.totalorder %s19, 0
      %p108 = por %p106, %p107
      %p109 = scmp.ne.s32.totalorder %s97, %s98
      %p110 = scmp.eq.s32.totalorder %s20, 1
      %p111 = por %p109, %p110
      %p113 = scmp.ne.s32.totalorder %s98, %s112
      %p114 = scmp.eq.s32.totalorder %s20, 0
      %p115 = por %p113, %p114
      %p116 = scmp.le.s32.totalorder 1, %s14
      %p117 = scmp.lt.s32.totalorder %s14, 3
      %p118 = pnand %p116, %p117
      %p119 = pneg %p118
      // Predicated region
      $region9: #{tpu_custom_call.1} parent=5 // pred_check
        _
      $region10: #{tpu_custom_call.1} parent=5 // pred_check_branch
        %121 = sbr.rel (%p118) target = $region12
      $region11: #{tpu_custom_call.1} parent=5 // pred_region
        %s122 = ssub.s32 %s14, 1
        // Predicated region
        $region13: #{tpu_custom_call.1} parent=11 // pred_check
          %p123 = pneg %p61
        $region14: #{tpu_custom_call.1} parent=11 // pred_check_branch
          %125 = sbr.rel (%p123) target = $region16
        $region15: #{tpu_custom_call.1} parent=11 // pred_region
          _
        $region16: #{tpu_custom_call.1} parent=11 // pred_fallthru
          _
      $region12: #{tpu_custom_call.1} parent=5 // pred_fallthru
        _
      %p126 = scmp.lt.s32.totalorder %s14, 2
      // Predicated region
      $region17: #{tpu_custom_call.1} parent=5 // pred_check
        %p127 = pneg %p126
      $region18: #{tpu_custom_call.1} parent=5 // pred_check_branch
        %129 = sbr.rel (%p127) target = $region20
      $region19: #{tpu_custom_call.1} parent=5 // pred_region
        // Predicated region
        $region21: #{tpu_custom_call.1} parent=19 // pred_check
          %p130 = pneg %p34
        $region22: #{tpu_custom_call.1} parent=19 // pred_check_branch
          %132 = sbr.rel (%p130) target = $region24
        $region23: #{tpu_custom_call.1} parent=19 // pred_region
          %p133 = scmp.lt.s32.totalorder %s14, 1
          %s134 = scalar_select %p133, %s14, 1
          %s135 = smul.addr %s134, 3
          %s136 = smul.addr %s135, 8
          %s137 = scalar_lea.vmem %s0, %s136
        $region24: #{tpu_custom_call.1} parent=19 // pred_fallthru
          _
      $region20: #{tpu_custom_call.1} parent=5 // pred_fallthru
        _
      %p138 = scmp.le.s32.totalorder 1, %s14
      %p139 = scmp.lt.s32.totalorder %s14, 3
      %p140 = pnand %p138, %p139
      %p141 = pneg %p140
      // Predicated region
      $region25: #{tpu_custom_call.1} parent=5 // pred_check
        _
      $region26: #{tpu_custom_call.1} parent=5 // pred_check_branch
        %143 = sbr.rel (%p140) target = $region28
      $region27: #{tpu_custom_call.1} parent=5 // pred_region
        %s144 = ssub.s32 %s14, 1
        %p145 = scmp.lt.s32.totalorder %s19, 1
        %s146 = scalar_select %p145, %s19, 1
        %s147 = smul.addr %s146, 3
        %s148 = smul.addr %s147, 8
        %s149 = scalar_lea.vmem %s0, %s148
        %p150 = pneg %p40
        %p151 = pneg %p37
        %p152 = pneg %p61
        %p153 = pneg %p58
        %p154 = pneg %p87
        %p155 = pneg %p84
        %s156 = sand.u32 %s74, 1
        %s157 = scalar_lea.sflag [#allocation3], %s156
        %s158 = sand.u32 %s74, 1
        %s159 = smul.addr %s158, 16
        %s160 = scalar_lea.vmem [#allocation2], %s159
        %p161 = pneg %p108
        %p162 = pneg %p105
        %p163 = scmp.lt.s32.totalorder %s19, 1
        %s164 = scalar_select %p163, %s19, 1
        %s165 = smul.addr %s164, 3
        %s166 = smul.addr %s165, 8
        %s167 = scalar_lea.vmem %s0, %s166
        %p168 = scmp.eq.s32.totalorder %s19, 0
        // Predicated region
        $region29: #{tpu_custom_call.1} parent=27 // pred_check
          %p169 = pneg %p168
        $region30: #{tpu_custom_call.1} parent=27 // pred_check_branch
          %171 = sbr.rel (%p169) target = $region32
        $region31: #{tpu_custom_call.1} parent=27 // pred_region
          %vm172 = vcmask 386048
          %173 = vst.msk [vmem:[#allocation4] sm:$0x3] %vm172, 0.0
        $region32: #{tpu_custom_call.1} parent=27 // pred_fallthru
          _
        %v174 = vld [vmem:[%s167] sm:$0xff]
        %v175 = vld [vmem:[%s167 + $0x8] sm:$0xff]
        %v176 = vld [vmem:[%s167 + $0x10] sm:$0xf]
        %v177 = vld [vmem:[%s1] sm:$0xff]
        %v178 = vld [vmem:[%s1 + $0x8] sm:$0xff]
        %v179 = vld [vmem:[%s1 + $0x10] sm:$0xff]
        %v180 = vld [vmem:[%s1 + $0x18] sm:$0xff]
        %v181 = vld [vmem:[%s1 + $0x20] sm:$0xff]
        %v182 = vld [vmem:[%s1 + $0x28] sm:$0xff]
        %v183 = vld [vmem:[%s1 + $0x30] sm:$0xff]
        %v184 = vld [vmem:[%s1 + $0x38] sm:$0xff]
        %v185 = vld [vmem:[%s1 + $0x40] sm:$0xff]
        %v186 = vld [vmem:[%s1 + $0x48] sm:$0xff]
        %s187 = scalar_lea.vmem %s1, 80
        %v188 = vld [vmem:[%s187] sm:$0xff]
        %v189 = vld [vmem:[%s187 + $0x8] sm:$0xff]
        %v190 = vld [vmem:[%s187 + $0x10] sm:$0xff]
        %v191 = vld [vmem:[%s187 + $0x18] sm:$0xff]
        %v192 = vld [vmem:[%s187 + $0x20] sm:$0xff]
        %v193 = vld [vmem:[%s187 + $0x28] sm:$0xff]
        %v194 = vld [vmem:[%s187 + $0x30] sm:$0xff]
        %v195 = vld [vmem:[%s187 + $0x38] sm:$0xff]
        %v196 = vld [vmem:[%s187 + $0x40] sm:$0xff]
        %v197 = vld [vmem:[%s187 + $0x48] sm:$0xff]
        %vm201 = vcmask 1046528
        %v202 = vrot.slane %v174, 1
        %v203 = vrot.slane %v175, 1
        %v204 = vsel %vm201, %v202, %v203
        %v205 = vrot.slane %v176, 1
        %v206 = vsel %vm201, %v203, %v205
        %vm207 = vcmask 654336
        %v208 = vsel %vm207, %v204, 0
        %v210 = vsel %vm207, %v206, 0
        %212 = vmatprep.subr.mxu0 0.0
        %213 = vmatpush1.msra.mxu0 0.0
        %214 = vmatprep.subr.mxu0 0.0
        %215 = vmatpush1.msra.mxu0 0.0
        %216 = vmatprep.subr.mxu0 0.0
        %217 = vmatpush1.msra.mxu0 0.0
        %218 = vmatprep.subr.mxu0 0.0
        %219 = vmatpush1.msra.mxu0 0.0
        %220 = vmatprep.subr.mxu0 0.0
        %221 = vmatpush1.msra.mxu0 0.0
        %222 = vmatprep.subr.mxu0 0.0
        %223 = vmatpush1.msra.mxu0 0.0
        %224 = vmatprep.subr.mxu0 0.0
        %225 = vmatpush1.msra.mxu0 %v197
        %226 = vmatprep.subr.mxu0 0.0
        %227 = vmatpush1.msra.mxu0 %v196
        %228 = vmatprep.subr.mxu0 0.0
        %229 = vmatpush1.msra.mxu0 %v195
        %230 = vmatprep.subr.mxu0 0.0
        %231 = vmatpush1.msra.mxu0 %v194
        %232 = vmatprep.subr.mxu0 0.0
        %233 = vmatpush1.msra.mxu0 %v193
        %234 = vmatprep.subr.mxu0 0.0
        %235 = vmatpush1.msra.mxu0 %v192
        %236 = vmatprep.subr.mxu0 0.0
        %237 = vmatpush1.msra.mxu0 %v191
        %238 = vmatprep.subr.mxu0 0.0
        %239 = vmatpush1.msra.mxu0 %v190
        %240 = vmatprep.subr.mxu0 0.0
        %241 = vmatpush1.msra.mxu0 %v189
        %242 = vmatprep.subr.mxu0 0.0
        %243 = vmatpush1.msra.mxu0 %v188
        %244 = vmatprep.subr.mxu0 0.0
        %245 = vmatpush2.msra.mxu0 0.0
        %246 = vmatprep.subr.mxu0 0.0
        %247 = vmatpush2.msra.mxu0 0.0
        %248 = vmatprep.subr.mxu0 0.0
        %249 = vmatpush2.msra.mxu0 0.0
        %250 = vmatprep.subr.mxu0 0.0
        %251 = vmatpush2.msra.mxu0 0.0
        %252 = vmatprep.subr.mxu0 0.0
        %253 = vmatpush2.msra.mxu0 0.0
        %254 = vmatprep.subr.mxu0 0.0
        %255 = vmatpush2.msra.mxu0 0.0
        %256 = vmatprep.subr.mxu0 0.0
        %257 = vmatpush2.msra.mxu0 0.0
        %258 = vmatprep.subr.mxu0 0.0
        %259 = vmatpush2.msra.mxu0 0.0
        %260 = vmatprep.subr.mxu0 0.0
        %261 = vmatpush2.msra.mxu0 0.0
        %262 = vmatprep.subr.mxu0 0.0
        %263 = vmatpush2.msra.mxu0 0.0
        %264 = vmatprep.subr.mxu0 0.0
        %265 = vmatpush2.msra.mxu0 0.0
        %266 = vmatprep.subr.mxu0 0.0
        %267 = vmatpush2.msra.mxu0 0.0
        %268 = vmatprep.subr.mxu0 0.0
        %269 = vmatpush2.msra.mxu0 0.0
        %270 = vmatprep.subr.mxu0 0.0
        %271 = vmatpush2.msra.mxu0 0.0
        %272 = vmatprep.subr.mxu0 0.0
        %273 = vmatpush2.msra.mxu0 0.0
        %274 = vmatprep.subr.mxu0 0.0
        %275 = vmatpush2.msra.mxu0 0.0
        %276 = vmatprep.mubr.f32.mxu0 0.0
        %277 = vmatmul.mubr.f32.gmra.mxu0 %v208
        %v278 = vpop.f32.mrf.mxu0
        %v279 = vadd.f32 0.0, %v278
        %v280 = vpop.f32.mrf.mxu0
        %281 = vmatprep.mubr.f32.mxu0 0.0
        %282 = vmatmul.mubr.f32.gmra.mxu0 %v210
        %v283 = vpop.f32.mrf.mxu0
        %v284 = vadd.f32 0.0, %v283
        %v285 = vpop.f32.mrf.mxu0
        %286 = vdwg.mxu0
        %v287 = vsel %vm207, %v174, 0
        %v289 = vsel %vm207, %v175, 0
        %291 = vmatprep.subr.mxu0 0.0
        %292 = vmatpush1.msra.mxu0 0.0
        %293 = vmatprep.subr.mxu0 0.0
        %294 = vmatpush1.msra.mxu0 0.0
        %295 = vmatprep.subr.mxu0 0.0
        %296 = vmatpush1.msra.mxu0 0.0
        %297 = vmatprep.subr.mxu0 0.0
        %298 = vmatpush1.msra.mxu0 0.0
        %299 = vmatprep.subr.mxu0 0.0
        %300 = vmatpush1.msra.mxu0 0.0
        %301 = vmatprep.subr.mxu0 0.0
        %302 = vmatpush1.msra.mxu0 0.0
        %303 = vmatprep.subr.mxu0 0.0
        %304 = vmatpush1.msra.mxu0 %v186
        %305 = vmatprep.subr.mxu0 0.0
        %306 = vmatpush1.msra.mxu0 %v185
        %307 = vmatprep.subr.mxu0 0.0
        %308 = vmatpush1.msra.mxu0 %v184
        %309 = vmatprep.subr.mxu0 0.0
        %310 = vmatpush1.msra.mxu0 %v183
        %311 = vmatprep.subr.mxu0 0.0
        %312 = vmatpush1.msra.mxu0 %v182
        %313 = vmatprep.subr.mxu0 0.0
        %314 = vmatpush1.msra.mxu0 %v181
        %315 = vmatprep.subr.mxu0 0.0
        %316 = vmatpush1.msra.mxu0 %v180
        %317 = vmatprep.subr.mxu0 0.0
        %318 = vmatpush1.msra.mxu0 %v179
        %319 = vmatprep.subr.mxu0 0.0
        %320 = vmatpush1.msra.mxu0 %v178
        %321 = vmatprep.subr.mxu0 0.0
        %322 = vmatpush1.msra.mxu0 %v177
        %323 = vmatprep.subr.mxu0 0.0
        %324 = vmatpush2.msra.mxu0 0.0
        %325 = vmatprep.subr.mxu0 0.0
        %326 = vmatpush2.msra.mxu0 0.0
        %327 = vmatprep.subr.mxu0 0.0
        %328 = vmatpush2.msra.mxu0 0.0
        %329 = vmatprep.subr.mxu0 0.0
        %330 = vmatpush2.msra.mxu0 0.0
        %331 = vmatprep.subr.mxu0 0.0
        %332 = vmatpush2.msra.mxu0 0.0
        %333 = vmatprep.subr.mxu0 0.0
        %334 = vmatpush2.msra.mxu0 0.0
        %335 = vmatprep.subr.mxu0 0.0
        %336 = vmatpush2.msra.mxu0 0.0
        %337 = vmatprep.subr.mxu0 0.0
        %338 = vmatpush2.msra.mxu0 0.0
        %339 = vmatprep.subr.mxu0 0.0
        %340 = vmatpush2.msra.mxu0 0.0
        %341 = vmatprep.subr.mxu0 0.0
        %342 = vmatpush2.msra.mxu0 0.0
        %343 = vmatprep.subr.mxu0 0.0
        %344 = vmatpush2.msra.mxu0 0.0
        %345 = vmatprep.subr.mxu0 0.0
        %346 = vmatpush2.msra.mxu0 0.0
        %347 = vmatprep.subr.mxu0 0.0
        %348 = vmatpush2.msra.mxu0 0.0
        %349 = vmatprep.subr.mxu0 0.0
        %350 = vmatpush2.msra.mxu0 0.0
        %351 = vmatprep.subr.mxu0 0.0
        %352 = vmatpush2.msra.mxu0 0.0
        %353 = vmatprep.subr.mxu0 0.0
        %354 = vmatpush2.msra.mxu0 0.0
        %355 = vmatprep.mubr.f32.mxu0 0.0
        %356 = vmatmul.mubr.f32.gmra.mxu0 %v287
        %v357 = vpop.f32.mrf.mxu0
        %v358 = vadd.f32 %v279, %v357
        %v359 = vpop.f32.mrf.mxu0
        %360 = vmatprep.mubr.f32.mxu0 0.0
        %361 = vmatmul.mubr.f32.gmra.mxu0 %v289
        %v362 = vpop.f32.mrf.mxu0
        %v363 = vadd.f32 %v284, %v362
        %v364 = vpop.f32.mrf.mxu0
        %365 = vdwg.mxu0
        %s366 = scalar_lea.vmem %s1, 160
        %v367 = vld [vmem:[%s366] sm:$0xff]
        %v368 = vld [vmem:[%s366 + $0x8] sm:$0xff]
        %v369 = vld [vmem:[%s366 + $0x10] sm:$0xff]
        %v370 = vld [vmem:[%s366 + $0x18] sm:$0xff]
        %v371 = vld [vmem:[%s366 + $0x20] sm:$0xff]
        %v372 = vld [vmem:[%s366 + $0x28] sm:$0xff]
        %v373 = vld [vmem:[%s366 + $0x30] sm:$0xff]
        %v374 = vld [vmem:[%s366 + $0x38] sm:$0xff]
        %v375 = vld [vmem:[%s366 + $0x40] sm:$0xff]
        %v376 = vld [vmem:[%s366 + $0x48] sm:$0xff]
        %vm377 = vcmask 1045504
        %v378 = vrot.slane %v174, 2
        %v379 = vrot.slane %v175, 2
        %v380 = vsel %vm377, %v378, %v379
        %v381 = vrot.slane %v176, 2
        %v382 = vsel %vm377, %v379, %v381
        %v383 = vsel %vm207, %v380, 0
        %v385 = vsel %vm207, %v382, 0
        %387 = vmatprep.subr.mxu0 0.0
        %388 = vmatpush1.msra.mxu0 0.0
        %389 = vmatprep.subr.mxu0 0.0
        %390 = vmatpush1.msra.mxu0 0.0
        %391 = vmatprep.subr.mxu0 0.0
        %392 = vmatpush1.msra.mxu0 0.0
        %393 = vmatprep.subr.mxu0 0.0
        %394 = vmatpush1.msra.mxu0 0.0
        %395 = vmatprep.subr.mxu0 0.0
        %396 = vmatpush1.msra.mxu0 0.0
        %397 = vmatprep.subr.mxu0 0.0
        %398 = vmatpush1.msra.mxu0 0.0
        %399 = vmatprep.subr.mxu0 0.0
        %400 = vmatpush1.msra.mxu0 %v376
        %401 = vmatprep.subr.mxu0 0.0
        %402 = vmatpush1.msra.mxu0 %v375
        %403 = vmatprep.subr.mxu0 0.0
        %404 = vmatpush1.msra.mxu0 %v374
        %405 = vmatprep.subr.mxu0 0.0
        %406 = vmatpush1.msra.mxu0 %v373
        %407 = vmatprep.subr.mxu0 0.0
        %408 = vmatpush1.msra.mxu0 %v372
        %409 = vmatprep.subr.mxu0 0.0
        %410 = vmatpush1.msra.mxu0 %v371
        %411 = vmatprep.subr.mxu0 0.0
        %412 = vmatpush1.msra.mxu0 %v370
        %413 = vmatprep.subr.mxu0 0.0
        %414 = vmatpush1.msra.mxu0 %v369
        %415 = vmatprep.subr.mxu0 0.0
        %416 = vmatpush1.msra.mxu0 %v368
        %417 = vmatprep.subr.mxu0 0.0
        %418 = vmatpush1.msra.mxu0 %v367
        %419 = vmatprep.subr.mxu0 0.0
        %420 = vmatpush2.msra.mxu0 0.0
        %421 = vmatprep.subr.mxu0 0.0
        %422 = vmatpush2.msra.mxu0 0.0
        %423 = vmatprep.subr.mxu0 0.0
        %424 = vmatpush2.msra.mxu0 0.0
        %425 = vmatprep.subr.mxu0 0.0
        %426 = vmatpush2.msra.mxu0 0.0
        %427 = vmatprep.subr.mxu0 0.0
        %428 = vmatpush2.msra.mxu0 0.0
        %429 = vmatprep.subr.mxu0 0.0
        %430 = vmatpush2.msra.mxu0 0.0
        %431 = vmatprep.subr.mxu0 0.0
        %432 = vmatpush2.msra.mxu0 0.0
        %433 = vmatprep.subr.mxu0 0.0
        %434 = vmatpush2.msra.mxu0 0.0
        %435 = vmatprep.subr.mxu0 0.0
        %436 = vmatpush2.msra.mxu0 0.0
        %437 = vmatprep.subr.mxu0 0.0
        %438 = vmatpush2.msra.mxu0 0.0
        %439 = vmatprep.subr.mxu0 0.0
        %440 = vmatpush2.msra.mxu0 0.0
        %441 = vmatprep.subr.mxu0 0.0
        %442 = vmatpush2.msra.mxu0 0.0
        %443 = vmatprep.subr.mxu0 0.0
        %444 = vmatpush2.msra.mxu0 0.0
        %445 = vmatprep.subr.mxu0 0.0
        %446 = vmatpush2.msra.mxu0 0.0
        %447 = vmatprep.subr.mxu0 0.0
        %448 = vmatpush2.msra.mxu0 0.0
        %449 = vmatprep.subr.mxu0 0.0
        %450 = vmatpush2.msra.mxu0 0.0
        %451 = vmatprep.mubr.f32.mxu0 0.0
        %452 = vmatmul.mubr.f32.gmra.mxu0 %v383
        %v453 = vpop.f32.mrf.mxu0
        %v454 = vadd.f32 0.0, %v453
        %v455 = vpop.f32.mrf.mxu0
        %456 = vmatprep.mubr.f32.mxu0 0.0
        %457 = vmatmul.mubr.f32.gmra.mxu0 %v385
        %v458 = vpop.f32.mrf.mxu0
        %v459 = vadd.f32 0.0, %v458
        %v460 = vpop.f32.mrf.mxu0
        %461 = vdwg.mxu0
        %v462 = vadd.f32 %v358, %v454
        %v463 = vadd.f32 %v363, %v459
        %s464 = scalar_lea.vmem %s1, 240
        %v465 = vld [vmem:[%s464] sm:$0xff]
        %v466 = vld [vmem:[%s464 + $0x8] sm:$0xff]
        %v467 = vld [vmem:[%s464 + $0x10] sm:$0xff]
        %v468 = vld [vmem:[%s464 + $0x18] sm:$0xff]
        %v469 = vld [vmem:[%s464 + $0x20] sm:$0xff]
        %v470 = vld [vmem:[%s464 + $0x28] sm:$0xff]
        %v471 = vld [vmem:[%s464 + $0x30] sm:$0xff]
        %v472 = vld [vmem:[%s464 + $0x38] sm:$0xff]
        %v473 = vld [vmem:[%s464 + $0x40] sm:$0xff]
        %v474 = vld [vmem:[%s464 + $0x48] sm:$0xff]
        %vm475 = vcmask 1044480
        %v476 = vrot.slane %v174, 3
        %v477 = vrot.slane %v175, 3
        %v478 = vsel %vm475, %v476, %v477
        %v479 = vrot.slane %v176, 3
        %v480 = vsel %vm475, %v477, %v479
        %v481 = vsel %vm207, %v478, 0
        %v483 = vsel %vm207, %v480, 0
        %485 = vmatprep.subr.mxu0 0.0
        %486 = vmatpush1.msra.mxu0 0.0
        %487 = vmatprep.subr.mxu0 0.0
        %488 = vmatpush1.msra.mxu0 0.0
        %489 = vmatprep.subr.mxu0 0.0
        %490 = vmatpush1.msra.mxu0 0.0
        %491 = vmatprep.subr.mxu0 0.0
        %492 = vmatpush1.msra.mxu0 0.0
        %493 = vmatprep.subr.mxu0 0.0
        %494 = vmatpush1.msra.mxu0 0.0
        %495 = vmatprep.subr.mxu0 0.0
        %496 = vmatpush1.msra.mxu0 0.0
        %497 = vmatprep.subr.mxu0 0.0
        %498 = vmatpush1.msra.mxu0 %v474
        %499 = vmatprep.subr.mxu0 0.0
        %500 = vmatpush1.msra.mxu0 %v473
        %501 = vmatprep.subr.mxu0 0.0
        %502 = vmatpush1.msra.mxu0 %v472
        %503 = vmatprep.subr.mxu0 0.0
        %504 = vmatpush1.msra.mxu0 %v471
        %505 = vmatprep.subr.mxu0 0.0
        %506 = vmatpush1.msra.mxu0 %v470
        %507 = vmatprep.subr.mxu0 0.0
        %508 = vmatpush1.msra.mxu0 %v469
        %509 = vmatprep.subr.mxu0 0.0
        %510 = vmatpush1.msra.mxu0 %v468
        %511 = vmatprep.subr.mxu0 0.0
        %512 = vmatpush1.msra.mxu0 %v467
        %513 = vmatprep.subr.mxu0 0.0
        %514 = vmatpush1.msra.mxu0 %v466
        %515 = vmatprep.subr.mxu0 0.0
        %516 = vmatpush1.msra.mxu0 %v465
        %517 = vmatprep.subr.mxu0 0.0
        %518 = vmatpush2.msra.mxu0 0.0
        %519 = vmatprep.subr.mxu0 0.0
        %520 = vmatpush2.msra.mxu0 0.0
        %521 = vmatprep.subr.mxu0 0.0
        %522 = vmatpush2.msra.mxu0 0.0
        %523 = vmatprep.subr.mxu0 0.0
        %524 = vmatpush2.msra.mxu0 0.0
        %525 = vmatprep.subr.mxu0 0.0
        %526 = vmatpush2.msra.mxu0 0.0
        %527 = vmatprep.subr.mxu0 0.0
        %528 = vmatpush2.msra.mxu0 0.0
        %529 = vmatprep.subr.mxu0 0.0
        %530 = vmatpush2.msra.mxu0 0.0
        %531 = vmatprep.subr.mxu0 0.0
        %532 = vmatpush2.msra.mxu0 0.0
        %533 = vmatprep.subr.mxu0 0.0
        %534 = vmatpush2.msra.mxu0 0.0
        %535 = vmatprep.subr.mxu0 0.0
        %536 = vmatpush2.msra.mxu0 0.0
        %537 = vmatprep.subr.mxu0 0.0
        %538 = vmatpush2.msra.mxu0 0.0
        %539 = vmatprep.subr.mxu0 0.0
        %540 = vmatpush2.msra.mxu0 0.0
        %541 = vmatprep.subr.mxu0 0.0
        %542 = vmatpush2.msra.mxu0 0.0
        %543 = vmatprep.subr.mxu0 0.0
        %544 = vmatpush2.msra.mxu0 0.0
        %545 = vmatprep.subr.mxu0 0.0
        %546 = vmatpush2.msra.mxu0 0.0
        %547 = vmatprep.subr.mxu0 0.0
        %548 = vmatpush2.msra.mxu0 0.0
        %549 = vmatprep.mubr.f32.mxu0 0.0
        %550 = vmatmul.mubr.f32.gmra.mxu0 %v481
        %v551 = vpop.f32.mrf.mxu0
        %v552 = vadd.f32 0.0, %v551
        %v553 = vpop.f32.mrf.mxu0
        %554 = vmatprep.mubr.f32.mxu0 0.0
        %555 = vmatmul.mubr.f32.gmra.mxu0 %v483
        %v556 = vpop.f32.mrf.mxu0
        %v557 = vadd.f32 0.0, %v556
        %v558 = vpop.f32.mrf.mxu0
        %559 = vdwg.mxu0
        %v560 = vadd.f32 %v462, %v552
        %v561 = vadd.f32 %v463, %v557
        %s562 = scalar_lea.vmem %s1, 320
        %v563 = vld [vmem:[%s562] sm:$0xff]
        %v564 = vld [vmem:[%s562 + $0x8] sm:$0xff]
        %v565 = vld [vmem:[%s562 + $0x10] sm:$0xff]
        %v566 = vld [vmem:[%s562 + $0x18] sm:$0xff]
        %v567 = vld [vmem:[%s562 + $0x20] sm:$0xff]
        %v568 = vld [vmem:[%s562 + $0x28] sm:$0xff]
        %v569 = vld [vmem:[%s562 + $0x30] sm:$0xff]
        %v570 = vld [vmem:[%s562 + $0x38] sm:$0xff]
        %v571 = vld [vmem:[%s562 + $0x40] sm:$0xff]
        %v572 = vld [vmem:[%s562 + $0x48] sm:$0xff]
        %vm573 = vcmask 1043456
        %v574 = vrot.slane %v174, 4
        %v575 = vrot.slane %v175, 4
        %v576 = vsel %vm573, %v574, %v575
        %v577 = vrot.slane %v176, 4
        %v578 = vsel %vm573, %v575, %v577
        %v579 = vsel %vm207, %v576, 0
        %v581 = vsel %vm207, %v578, 0
        %583 = vmatprep.subr.mxu0 0.0
        %584 = vmatpush1.msra.mxu0 0.0
        %585 = vmatprep.subr.mxu0 0.0
        %586 = vmatpush1.msra.mxu0 0.0
        %587 = vmatprep.subr.mxu0 0.0
        %588 = vmatpush1.msra.mxu0 0.0
        %589 = vmatprep.subr.mxu0 0.0
        %590 = vmatpush1.msra.mxu0 0.0
        %591 = vmatprep.subr.mxu0 0.0
        %592 = vmatpush1.msra.mxu0 0.0
        %593 = vmatprep.subr.mxu0 0.0
        %594 = vmatpush1.msra.mxu0 0.0
        %595 = vmatprep.subr.mxu0 0.0
        %596 = vmatpush1.msra.mxu0 %v572
        %597 = vmatprep.subr.mxu0 0.0
        %598 = vmatpush1.msra.mxu0 %v571
        %599 = vmatprep.subr.mxu0 0.0
        %600 = vmatpush1.msra.mxu0 %v570
        %601 = vmatprep.subr.mxu0 0.0
        %602 = vmatpush1.msra.mxu0 %v569
        %603 = vmatprep.subr.mxu0 0.0
        %604 = vmatpush1.msra.mxu0 %v568
        %605 = vmatprep.subr.mxu0 0.0
        %606 = vmatpush1.msra.mxu0 %v567
        %607 = vmatprep.subr.mxu0 0.0
        %608 = vmatpush1.msra.mxu0 %v566
        %609 = vmatprep.subr.mxu0 0.0
        %610 = vmatpush1.msra.mxu0 %v565
        %611 = vmatprep.subr.mxu0 0.0
        %612 = vmatpush1.msra.mxu0 %v564
        %613 = vmatprep.subr.mxu0 0.0
        %614 = vmatpush1.msra.mxu0 %v563
        %615 = vmatprep.subr.mxu0 0.0
        %616 = vmatpush2.msra.mxu0 0.0
        %617 = vmatprep.subr.mxu0 0.0
        %618 = vmatpush2.msra.mxu0 0.0
        %619 = vmatprep.subr.mxu0 0.0
        %620 = vmatpush2.msra.mxu0 0.0
        %621 = vmatprep.subr.mxu0 0.0
        %622 = vmatpush2.msra.mxu0 0.0
        %623 = vmatprep.subr.mxu0 0.0
        %624 = vmatpush2.msra.mxu0 0.0
        %625 = vmatprep.subr.mxu0 0.0
        %626 = vmatpush2.msra.mxu0 0.0
        %627 = vmatprep.subr.mxu0 0.0
        %628 = vmatpush2.msra.mxu0 0.0
        %629 = vmatprep.subr.mxu0 0.0
        %630 = vmatpush2.msra.mxu0 0.0
        %631 = vmatprep.subr.mxu0 0.0
        %632 = vmatpush2.msra.mxu0 0.0
        %633 = vmatprep.subr.mxu0 0.0
        %634 = vmatpush2.msra.mxu0 0.0
        %635 = vmatprep.subr.mxu0 0.0
        %636 = vmatpush2.msra.mxu0 0.0
        %637 = vmatprep.subr.mxu0 0.0
        %638 = vmatpush2.msra.mxu0 0.0
        %639 = vmatprep.subr.mxu0 0.0
        %640 = vmatpush2.msra.mxu0 0.0
        %641 = vmatprep.subr.mxu0 0.0
        %642 = vmatpush2.msra.mxu0 0.0
        %643 = vmatprep.subr.mxu0 0.0
        %644 = vmatpush2.msra.mxu0 0.0
        %645 = vmatprep.subr.mxu0 0.0
        %646 = vmatpush2.msra.mxu0 0.0
        %647 = vmatprep.mubr.f32.mxu0 0.0
        %648 = vmatmul.mubr.f32.gmra.mxu0 %v579
        %v649 = vpop.f32.mrf.mxu0
        %v650 = vadd.f32 0.0, %v649
        %v651 = vpop.f32.mrf.mxu0
        %652 = vmatprep.mubr.f32.mxu0 0.0
        %653 = vmatmul.mubr.f32.gmra.mxu0 %v581
        %v654 = vpop.f32.mrf.mxu0
        %v655 = vadd.f32 0.0, %v654
        %v656 = vpop.f32.mrf.mxu0
        %657 = vdwg.mxu0
        %v658 = vadd.f32 %v560, %v650
        %v659 = vadd.f32 %v561, %v655
        %vm660 = vcmask 392192
        %661 = vst.msk [vmem:[%s160] sm:$0xff] %vm660, %v658
        %662 = vst.msk [vmem:[%s160 + $0x8] sm:$0xff] %vm660, %v659
        %v663 = vld [vmem:[#allocation4] sm:$0x1]
        %v664 = vsel %vm660, %v658, 0.0
        %v665 = vsel %vm660, %v659, 0.0
        %v666 = vadd.f32 %v664, %v665
        %v667 = vrot.slane %v666, 4
        %v668 = vadd.f32 %v666, %v667
        %v669 = vrot.slane %v668, 2
        %v670 = vadd.f32 %v668, %v669
        %v671 = vrot.slane %v670, 1
        %v672 = vadd.f32 %v670, %v671
        %v673 = vadd.f32 %v663, %v672
        %vm674 = vcmask 385024
        %675 = vst.msk [vmem:[#allocation4] sm:$0x1] %vm674, %v673
        %v676 = vld [vmem:[#allocation4 + $0x1] sm:$0x1]
        %v677 = vmul.f32 %v658, %v658
        %v678 = vmul.f32 %v659, %v659
        %v679 = vsel %vm660, %v677, 0.0
        %v680 = vsel %vm660, %v678, 0.0
        %v681 = vadd.f32 %v679, %v680
        %v682 = vrot.slane %v681, 4
        %v683 = vadd.f32 %v681, %v682
        %v684 = vrot.slane %v683, 2
        %v685 = vadd.f32 %v683, %v684
        %v686 = vrot.slane %v685, 1
        %v687 = vadd.f32 %v685, %v686
        %v688 = vadd.f32 %v676, %v687
        %689 = vst.msk [vmem:[#allocation4 + $0x1] sm:$0x1] %vm674, %v688
        %s690 = sand.u32 %s74, 1
        %s691 = scalar_lea.sflag [#allocation3], %s690
        %s692 = sand.u32 %s74, 1
        %s693 = smul.addr %s692, 16
        %s694 = scalar_lea.vmem [#allocation2], %s693
        // Predicated region
        $region33: #{tpu_custom_call.1} parent=27 // pred_check
          %p695 = pneg %p84
        $region34: #{tpu_custom_call.1} parent=27 // pred_check_branch
          %697 = sbr.rel (%p695) target = $region36
        $region35: #{tpu_custom_call.1} parent=27 // pred_region
          %s699 = ssub.s32 256, 256
          %700 = vsyncadd %s691, %s699
          %s701 = smul.addr %s19, 2
          %s702 = smul.addr %s701, 128
          %s703 = scalar_lea.hbm %s2, %s702
          %s704 = sshll.u32 %s694, 4
          %s705 = int_to_ptr.vmem [resolvable:$true] %s704
          %710 = dma.vmem_to_hbm [thread:$0]  %s705, 256, %s703, %s691, 128, 128, 8
        $region36: #{tpu_custom_call.1} parent=27 // pred_fallthru
          _
        // Predicated region
        $region37: #{tpu_custom_call.1} parent=27 // pred_check
          %p711 = pneg %p105
        $region38: #{tpu_custom_call.1} parent=27 // pred_check_branch
          %713 = sbr.rel (%p711) target = $region40
        $region39: #{tpu_custom_call.1} parent=27 // pred_region
          %s715 = ssub.s32 32, 32
          %716 = vsyncadd [#allocation5], %s715
          %s718 = sshll.u32 [#allocation4], 4
          %s719 = int_to_ptr.vmem [resolvable:$true] %s718
          %721 = dma.vmem_to_hbm [thread:$0]  %s719, 32, %s3, [#allocation5]
        $region40: #{tpu_custom_call.1} parent=27 // pred_fallthru
          _
        // Predicated region
        $region41: #{tpu_custom_call.1} parent=27 // pred_check
          %p722 = pneg %p105
        $region42: #{tpu_custom_call.1} parent=27 // pred_check_branch
          %724 = sbr.rel (%p722) target = $region44
        $region43: #{tpu_custom_call.1} parent=27 // pred_region
          %725 = dma.done [#allocation5], 32
        $region44: #{tpu_custom_call.1} parent=27 // pred_fallthru
          _
      $region28: #{tpu_custom_call.1} parent=5 // pred_fallthru
        _
      %p726 = scmp.le.s32.totalorder 2, %s14
      // Predicated region
      $region45: #{tpu_custom_call.1} parent=5 // pred_check
        %p727 = pneg %p726
      $region46: #{tpu_custom_call.1} parent=5 // pred_check_branch
        %729 = sbr.rel (%p727) target = $region48
      $region47: #{tpu_custom_call.1} parent=5 // pred_region
        %s730 = ssub.s32 %s14, 2
        // Predicated region
        $region49: #{tpu_custom_call.1} parent=47 // pred_check
          %p731 = pneg %p90
        $region50: #{tpu_custom_call.1} parent=47 // pred_check_branch
          %733 = sbr.rel (%p731) target = $region52
        $region51: #{tpu_custom_call.1} parent=47 // pred_region
          %s734 = sand.u32 %s75, 1
          %s735 = scalar_lea.sflag [#allocation3], %s734
          %s736 = sand.u32 %s75, 1
          %s737 = smul.addr %s736, 16
          %s738 = scalar_lea.vmem [#allocation2], %s737
          %739 = dma.done %s735, 256
        $region52: #{tpu_custom_call.1} parent=47 // pred_fallthru
          _
      $region48: #{tpu_custom_call.1} parent=5 // pred_fallthru
        _
    $region6: #{tpu_custom_call.1} parent=1 // loop_footer
      %s18 = sadd.s32 1, %s14
    $region7: #{tpu_custom_call.1} parent=1 // loop_footer_branch
      %13 = sbr.rel target = $region3
    $region8: #{tpu_custom_call.1} parent=1 // loop_exit
      _
    %740 = vsyncpa [#allocation3], 1
    %s741 = scalar_lea.sflag [#allocation3], 1
    %742 = vsyncpa %s741, 1
    %743 = vsyncpa [#allocation5], 1

</llo_original>
